<compile_context>
chip_gen: v6e
topology: v6e:2x2x1
jax: 0.10.0
libtpu: 0.0.40
codegen_flags: <defaults>
</compile_context>

<pallas_src>
import math

import jax
import jax.numpy as jnp
from jax.experimental import pallas as pl
from jax.experimental.pallas import tpu as pltpu

_HALF_LOG_2PI = 0.5 * math.log(2.0 * math.pi)


def _round_up(n, m):
    return ((n + m - 1) // m) * m


def actor_kernel(x_ref, eps_ref, w1_ref, b1_ref, wh_ref, bh_ref, out_ref):
    """One batch tile: fc1+ReLU, fused lane-padded mean||std head, clamp, rsample, tanh, log_prob."""
    apad = eps_ref.shape[-1]  # lane-padded action width (multiple of 128)

    # fc1 + ReLU  (bf16 MXU operands, f32 accumulation; elementwise stays f32).
    x = x_ref[...]
    h = jnp.dot(x.astype(jnp.bfloat16), w1_ref[...],
                preferred_element_type=jnp.float32) + b1_ref[...]
    h = jnp.maximum(h, 0.0)

    # Fused mean/std head: one (hidden, 2*Apad) matmul; 128-aligned slices are free.
    ms = jnp.dot(h.astype(jnp.bfloat16), wh_ref[...],
                 preferred_element_type=jnp.float32) + bh_ref[...]
    mean = ms[:, :apad]
    std = jnp.clip(ms[:, apad:], 1e-6, 1.0)          # torch.clamp(std, min=1e-6, max=1)

    # rsample(): sample = mean + std * eps, eps ~ N(0, 1) (precomputed, full-lane tile).
    sample = mean + std * eps_ref[...]
    action = jnp.tanh(sample)

    # log_pi = Normal(mean, std).log_prob(action)
    z = (action - mean) / std
    log_pi = -0.5 * (z * z) - jnp.log(std) - _HALF_LOG_2PI

    # Lane-dense stores into the packed slab [action | log_pi | mean | std].
    out_ref[:, 0 * apad:1 * apad] = action
    out_ref[:, 1 * apad:2 * apad] = log_pi
    out_ref[:, 2 * apad:3 * apad] = mean
    out_ref[:, 3 * apad:4 * apad] = std


def _tile_plan(b, num_inputs, apad):
    """Pick (tile_b, padded_batch): multiple of 16, VMEM-budgeted, minimal padding, grid>=2 if possible."""
    # Double-buffered f32 tiles: x (num_inputs) + eps (apad) inputs, 4*apad output.
    per_row_bytes = 8 * (num_inputs + 5 * apad)
    budget = 24 * 1024 * 1024                        # headroom under 32 MiB scoped VMEM (v7x-safe)
    cap = max(16, min(4096, (budget // per_row_bytes) // 16 * 16))

    b16 = _round_up(b, 16)
    if b16 >= 32:
        num_tiles = max(2, pl.cdiv(b16, cap))        # >=2 grid steps -> both TCs on v7x
    else:
        num_tiles = 1
    tile_b = _round_up(pl.cdiv(b16, num_tiles), 16)
    bp = _round_up(b, tile_b)
    return tile_b, bp


def _actor_forward_packed(x, params, seed):
    """Runs the fused Actor kernel; returns packed (B, 4*Apad) = [action|log_pi|mean|std]."""
    b, num_inputs = x.shape
    hidden = params["w1"].shape[1]
    two_apad = params["wh"].shape[1]
    apad = two_apad // 2

    tile_b, bp = _tile_plan(b, num_inputs, apad)
    if bp != b:
        x = jnp.pad(x, ((0, bp - b), (0, 0)))

    # Reparameterization noise (deterministic from `seed`), lane-padded to Apad.
    eps = jax.random.normal(jax.random.PRNGKey(seed), (bp, apad), jnp.float32)

    grid = (bp // tile_b,)
    packed = pl.pallas_call(
        actor_kernel,
        out_shape=jax.ShapeDtypeStruct((bp, 4 * apad), jnp.float32),
        grid=grid,
        in_specs=[
            pl.BlockSpec((tile_b, num_inputs), lambda i: (i, 0)),
            pl.BlockSpec((tile_b, apad),       lambda i: (i, 0)),
            pl.BlockSpec((num_inputs, hidden), lambda i: (0, 0)),   # weights resident
            pl.BlockSpec((1, hidden),          lambda i: (0, 0)),
            pl.BlockSpec((hidden, two_apad),   lambda i: (0, 0)),
            pl.BlockSpec((1, two_apad),        lambda i: (0, 0)),
        ],
        out_specs=pl.BlockSpec((tile_b, 4 * apad), lambda i: (i, 0)),
        compiler_params=pltpu.CompilerParams(
            dimension_semantics=("parallel",),       # batch axis -> both TCs on v7x
            vmem_limit_bytes=32 * 1024 * 1024),
    )(x, eps, params["w1"], params["b1"], params["wh"], params["bh"])

    return packed[:b]


def actor_forward(x, params, seed):
    """Actor.forward(x) -> (action, log_pi). Reparameterized noise derived from `seed`."""
    a = params["num_actions"]
    apad = params["wh"].shape[1] // 2
    packed = _actor_forward_packed(x, params, seed)
    return packed[:, :a], packed[:, apad:apad + a]


def init_params(key, num_inputs, num_actions, hidden_size):
    """nn.Linear-style init (uniform +/- 1/sqrt(fan_in)); mean/std heads fused and lane-padded.

    MXU weights stored bf16 (halves weight DMA bytes); biases stay f32.  The head weight/bias
    columns are zero-padded from A to Apad = round_up(A, 128) so every post-head tensor is
    full-lane (padded std columns clamp to 1e-6 and are sliced away by the wrapper).
    """
    k1, k2, k3, k4, k5, k6 = jax.random.split(key, 6)
    apad = _round_up(num_actions, 128)

    def lin(kw, kb, fan_in, fan_out):
        bound = 1.0 / math.sqrt(fan_in)
        w = jax.random.uniform(kw, (fan_in, fan_out), jnp.float32, -bound, bound)
        bias = jax.random.uniform(kb, (1, fan_out), jnp.float32, -bound, bound)
        return w, bias

    w1, b1 = lin(k1, k2, num_inputs, hidden_size)
    wm, bm = lin(k3, k4, hidden_size, num_actions)
    ws, bs = lin(k5, k6, hidden_size, num_actions)

    wh = jnp.zeros((hidden_size, 2 * apad), jnp.float32)
    wh = wh.at[:, :num_actions].set(wm)
    wh = wh.at[:, apad:apad + num_actions].set(ws)
    bh = jnp.zeros((1, 2 * apad), jnp.float32)
    bh = bh.at[:, :num_actions].set(bm)
    bh = bh.at[:, apad:apad + num_actions].set(bs)

    return {
        "w1": w1.astype(jnp.bfloat16), "b1": b1,
        "wh": wh.astype(jnp.bfloat16), "bh": bh,
        "num_actions": num_actions,
    }


if __name__ == "__main__":
    import numpy as np

    num_inputs, num_actions, hidden_size = 16, 8, 32
    batch = 8
    seed = 1234

    key = jax.random.PRNGKey(0)
    k_params, k_x = jax.random.split(key, 2)

    params = init_params(k_params, num_inputs, num_actions, hidden_size)
    x = jax.random.normal(k_x, (batch, num_inputs), jnp.float32)

    action, log_pi = actor_forward(x, params, seed)
    packed = _actor_forward_packed(x, params, seed)
    jax.block_until_ready((action, log_pi, packed))

    a = num_actions
    apad = params["wh"].shape[1] // 2
    mean_k = packed[:, 2 * apad:2 * apad + a]
    std_k = packed[:, 3 * apad:3 * apad + a]

    # Public wrapper must agree with the packed slab.
    assert jnp.allclose(action, packed[:, :a], rtol=1e-5, atol=1e-6), "wrapper action mismatch"
    assert jnp.allclose(log_pi, packed[:, apad:apad + a], rtol=1e-5, atol=1e-6), "wrapper log_pi mismatch"

    # --- pure-JAX reference (same eps, same bf16 matmul numerics) ---
    tile_b, bp = _tile_plan(batch, num_inputs, apad)
    eps_ref = jax.random.normal(jax.random.PRNGKey(seed), (bp, apad), jnp.float32)[:batch, :a]

    h_ref = jnp.maximum(
        jnp.dot(x.astype(jnp.bfloat16), params["w1"],
                preferred_element_type=jnp.float32) + params["b1"], 0.0)
    ms_ref = jnp.dot(h_ref.astype(jnp.bfloat16), params["wh"],
                     preferred_element_type=jnp.float32) + params["bh"]
    mean_ref = ms_ref[:, :a]
    std_ref = jnp.clip(ms_ref[:, apad:apad + a], 1e-6, 1.0)
    sample_ref = mean_ref + std_ref * eps_ref
    action_ref = jnp.tanh(sample_ref)
    z_ref = (action_ref - mean_ref) / std_ref
    log_pi_ref = -0.5 * z_ref * z_ref - jnp.log(std_ref) - _HALF_LOG_2PI

    assert bool(jnp.isfinite(packed).all()), "non-finite kernel output"
    assert bool((jnp.abs(action) <= 1.0).all()), "action outside [-1, 1]"
    assert jnp.allclose(mean_k, mean_ref, rtol=1e-3, atol=1e-3), "mean mismatch"
    assert jnp.allclose(std_k, std_ref, rtol=1e-3, atol=1e-3), "std mismatch"
    assert jnp.allclose(action, action_ref, rtol=2e-3, atol=2e-3), "action mismatch"
    assert jnp.allclose(log_pi, log_pi_ref, rtol=2e-3, atol=2e-3), "log_pi mismatch"

    # Sanity: noise implied by outputs is plausible standard-normal scale.
    act_np = np.asarray(action, dtype=np.float64)
    mean_np = np.asarray(mean_k, dtype=np.float64)
    std_np = np.asarray(std_k, dtype=np.float64)
    eps_rec = (np.arctanh(np.clip(act_np, -0.999999, 0.999999)) - mean_np) / np.maximum(std_np, 1e-3)
    assert np.isfinite(eps_rec).all() and np.abs(eps_rec).max() < 10.0, "implausible noise"

    print("KERNEL_OK")
</pallas_src>

<mosaic_0001>
module attributes {stable_mosaic.version = 11 : i64} {
  func.func @actor_kernel(%arg0: i32, %arg1: memref<16x16xf32, #tpu.memory_space<vmem>>, %arg2: memref<16x128xf32, #tpu.memory_space<vmem>>, %arg3: memref<16x32xbf16, #tpu.memory_space<vmem>>, %arg4: memref<1x32xf32, #tpu.memory_space<vmem>>, %arg5: memref<32x256xbf16, #tpu.memory_space<vmem>>, %arg6: memref<1x256xf32, #tpu.memory_space<vmem>>, %arg7: memref<16x512xf32, #tpu.memory_space<vmem>>) attributes {dimension_semantics = [#tpu.dimension_semantics<parallel>], iteration_bounds = array<i64: 1>, scalar_prefetch = 0 : i64, scratch_operands = 0 : i64, tpu.core_type = #tpu.core_type<tc>, window_params = [{transform_indices = @transform_0, window_bounds = array<i64: 16, 16>}, {transform_indices = @transform_1, window_bounds = array<i64: 16, 128>}, {pipeline_mode = #tpu.pipeline_mode<synchronous>, transform_indices = @transform_2, window_bounds = array<i64: 16, 32>}, {pipeline_mode = #tpu.pipeline_mode<synchronous>, transform_indices = @transform_3, window_bounds = array<i64: 1, 32>}, {pipeline_mode = #tpu.pipeline_mode<synchronous>, transform_indices = @transform_4, window_bounds = array<i64: 32, 256>}, {pipeline_mode = #tpu.pipeline_mode<synchronous>, transform_indices = @transform_5, window_bounds = array<i64: 1, 256>}, {transform_indices = @transform_6, window_bounds = array<i64: 16, 512>}]} {
    %c0 = arith.constant 0 : index
    %c0_0 = arith.constant 0 : index
    %0 = vector.load %arg1[%c0, %c0_0] : memref<16x16xf32, #tpu.memory_space<vmem>>, vector<16x16xf32>
    %1 = arith.truncf %0 : vector<16x16xf32> to vector<16x16xbf16>
    %c0_1 = arith.constant 0 : index
    %c0_2 = arith.constant 0 : index
    %2 = vector.load %arg3[%c0_1, %c0_2] : memref<16x32xbf16, #tpu.memory_space<vmem>>, vector<16x32xbf16>
    %cst = arith.constant dense<0.000000e+00> : vector<16x32xf32>
    %3 = tpu.matmul %1, %2, %cst {dimension_numbers = #tpu.dot_dimension_numbers<[1], [0], [0], [1], [0, 0, 1, 1], [], []>} : vector<16x16xbf16>, vector<16x32xbf16>, vector<16x32xf32> -> vector<16x32xf32>
    %c0_3 = arith.constant 0 : index
    %c0_4 = arith.constant 0 : index
    %4 = vector.load %arg4[%c0_3, %c0_4] : memref<1x32xf32, #tpu.memory_space<vmem>>, vector<1x32xf32>
    %5 = vector.broadcast %4 : vector<1x32xf32> to vector<16x32xf32>
    %6 = arith.addf %3, %5 : vector<16x32xf32>
    %cst_5 = arith.constant 0.000000e+00 : f32
    %7 = vector.broadcast %cst_5 : f32 to vector<16x32xf32>
    %8 = arith.maximumf %6, %7 : vector<16x32xf32>
    %9 = arith.truncf %8 : vector<16x32xf32> to vector<16x32xbf16>
    %c0_6 = arith.constant 0 : index
    %c0_7 = arith.constant 0 : index
    %10 = vector.load %arg5[%c0_6, %c0_7] : memref<32x256xbf16, #tpu.memory_space<vmem>>, vector<32x256xbf16>
    %cst_8 = arith.constant dense<0.000000e+00> : vector<16x256xf32>
    %11 = tpu.matmul %9, %10, %cst_8 {dimension_numbers = #tpu.dot_dimension_numbers<[1], [0], [0], [1], [0, 0, 1, 1], [], []>} : vector<16x32xbf16>, vector<32x256xbf16>, vector<16x256xf32> -> vector<16x256xf32>
    %c0_9 = arith.constant 0 : index
    %c0_10 = arith.constant 0 : index
    %12 = vector.load %arg6[%c0_9, %c0_10] : memref<1x256xf32, #tpu.memory_space<vmem>>, vector<1x256xf32>
    %13 = vector.broadcast %12 : vector<1x256xf32> to vector<16x256xf32>
    %14 = arith.addf %11, %13 : vector<16x256xf32>
    %15 = vector.extract_strided_slice %14 {offsets = [0, 0], sizes = [16, 128], strides = [1, 1]} : vector<16x256xf32> to vector<16x128xf32>
    %16 = vector.extract_strided_slice %14 {offsets = [0, 128], sizes = [16, 128], strides = [1, 1]} : vector<16x256xf32> to vector<16x128xf32>
    %cst_11 = arith.constant 9.99999997E-7 : f32
    %cst_12 = arith.constant 1.000000e+00 : f32
    %17 = vector.broadcast %cst_11 : f32 to vector<16x128xf32>
    %18 = arith.maximumf %17, %16 : vector<16x128xf32>
    %19 = vector.broadcast %cst_12 : f32 to vector<16x128xf32>
    %20 = arith.minimumf %19, %18 : vector<16x128xf32>
    %c0_13 = arith.constant 0 : index
    %c0_14 = arith.constant 0 : index
    %21 = vector.load %arg2[%c0_13, %c0_14] : memref<16x128xf32, #tpu.memory_space<vmem>>, vector<16x128xf32>
    %22 = arith.mulf %20, %21 : vector<16x128xf32>
    %23 = arith.addf %15, %22 : vector<16x128xf32>
    %24 = math.tanh %23 : vector<16x128xf32>
    %25 = arith.subf %24, %15 : vector<16x128xf32>
    %26 = arith.divf %25, %20 : vector<16x128xf32>
    %27 = arith.mulf %26, %26 : vector<16x128xf32>
    %cst_15 = arith.constant -5.000000e-01 : f32
    %28 = vector.broadcast %cst_15 : f32 to vector<16x128xf32>
    %29 = arith.mulf %28, %27 : vector<16x128xf32>
    %30 = math.log %20 : vector<16x128xf32>
    %31 = arith.subf %29, %30 : vector<16x128xf32>
    %cst_16 = arith.constant 0.918938517 : f32
    %32 = vector.broadcast %cst_16 : f32 to vector<16x128xf32>
    %33 = arith.subf %31, %32 : vector<16x128xf32>
    %c0_17 = arith.constant 0 : index
    %c0_18 = arith.constant 0 : index
    %34 = vector.load %arg7[%c0_17, %c0_18] : memref<16x512xf32, #tpu.memory_space<vmem>>, vector<16x128xf32>
    tpu.vector_store %arg7[%c0_17, %c0_18], %24 {strides = array<i32>} : memref<16x512xf32, #tpu.memory_space<vmem>>, vector<16x128xf32>,
    %c0_19 = arith.constant 0 : index
    %c128 = arith.constant 128 : index
    %35 = vector.load %arg7[%c0_19, %c128] : memref<16x512xf32, #tpu.memory_space<vmem>>, vector<16x128xf32>
    tpu.vector_store %arg7[%c0_19, %c128], %33 {strides = array<i32>} : memref<16x512xf32, #tpu.memory_space<vmem>>, vector<16x128xf32>,
    %c0_20 = arith.constant 0 : index
    %c256 = arith.constant 256 : index
    %36 = vector.load %arg7[%c0_20, %c256] : memref<16x512xf32, #tpu.memory_space<vmem>>, vector<16x128xf32>
    tpu.vector_store %arg7[%c0_20, %c256], %15 {strides = array<i32>} : memref<16x512xf32, #tpu.memory_space<vmem>>, vector<16x128xf32>,
    %c0_21 = arith.constant 0 : index
    %c384 = arith.constant 384 : index
    %37 = vector.load %arg7[%c0_21, %c384] : memref<16x512xf32, #tpu.memory_space<vmem>>, vector<16x128xf32>
    tpu.vector_store %arg7[%c0_21, %c384], %20 {strides = array<i32>} : memref<16x512xf32, #tpu.memory_space<vmem>>, vector<16x128xf32>,
    return
  }
  func.func @transform_0(%arg0: i32) -> (i32, i32) {
    %c0_i32 = arith.constant 0 : i32
    %c0_i32_0 = arith.constant 0 : i32
    return %arg0, %c0_i32 : i32, i32
  }
  func.func @transform_1(%arg0: i32) -> (i32, i32) {
    %c0_i32 = arith.constant 0 : i32
    %c0_i32_0 = arith.constant 0 : i32
    return %arg0, %c0_i32 : i32, i32
  }
  func.func @transform_2(%arg0: i32) -> (i32, i32) {
    %c0_i32 = arith.constant 0 : i32
    %c0_i32_0 = arith.constant 0 : i32
    %c0_i32_1 = arith.constant 0 : i32
    return %c0_i32, %c0_i32_0 : i32, i32
  }
  func.func @transform_3(%arg0: i32) -> (i32, i32) {
    %c0_i32 = arith.constant 0 : i32
    %c0_i32_0 = arith.constant 0 : i32
    %c0_i32_1 = arith.constant 0 : i32
    return %c0_i32, %c0_i32_0 : i32, i32
  }
  func.func @transform_4(%arg0: i32) -> (i32, i32) {
    %c0_i32 = arith.constant 0 : i32
    %c0_i32_0 = arith.constant 0 : i32
    %c0_i32_1 = arith.constant 0 : i32
    return %c0_i32, %c0_i32_0 : i32, i32
  }
  func.func @transform_5(%arg0: i32) -> (i32, i32) {
    %c0_i32 = arith.constant 0 : i32
    %c0_i32_0 = arith.constant 0 : i32
    %c0_i32_1 = arith.constant 0 : i32
    return %c0_i32, %c0_i32_0 : i32, i32
  }
  func.func @transform_6(%arg0: i32) -> (i32, i32) {
    %c0_i32 = arith.constant 0 : i32
    %c0_i32_0 = arith.constant 0 : i32
    return %arg0, %c0_i32 : i32, i32
  }
}

</mosaic_0001>

<llo_original>
// kernel: tpu_custom_call.1
$region0: #{tpu_custom_call.1}
  #allocation0 [shape = 'u32[]', space=smem, size = 0x4, offset = 0x4, fixed_abs, tag = 'smem constant byte address 0x4 - core index']
  #allocation1 [shape = 'u32[144,128]{1,0:T(1,128)}', space=vmem, size = 0x12000, scoped, tag = 'internal scratch']
  %s0 = inlined_call_operand.hbm [shape: f32[16,16], index: 0, kind: input, shape index: {}]
  %s1 = inlined_call_operand.hbm [shape: f32[16,128], index: 1, kind: input, shape index: {}]
  %s2 = inlined_call_operand.hbm [shape: bf16[16,32], index: 2, kind: input, shape index: {}]
  %s3 = inlined_call_operand.vmem [shape: f32[1,32], index: 3, kind: input, shape index: {}]
  %s4 = inlined_call_operand.hbm [shape: bf16[32,256], index: 4, kind: input, shape index: {}]
  %s5 = inlined_call_operand.vmem [shape: f32[1,256], index: 5, kind: input, shape index: {}]
  %s6 = inlined_call_operand.hbm [shape: f32[16,512], index: 6, kind: output, shape index: {}]
  %s7 = sld [smem:[#allocation0]]
  $region50: #{tpu_custom_call.1} parent=0
    _
  %s9 = ssub.s32 1, %s7
  %s10 = scalar_select 0, %s9, %s7
  $region1: #{tpu_custom_call.1} parent=0
    #allocation2 [shape = 'u8[8192]{0}', space=vmem, size = 0x2000, scoped, tag = 'input window, operand 0, single buffered']
    #allocation3 [shape = 's32[1]{0}', space=sflag, size = 0x4, scoped, tag = 'scoped memory for tpu_custom_call.1']
    #allocation4 [shape = 's32[1]{0}', space=sflag, size = 0x4, scoped, tag = 'scoped memory for tpu_custom_call.1']
    #allocation5 [shape = 'u8[8192]{0}', space=vmem, size = 0x2000, scoped, tag = 'input window, operand 1, single buffered']
    #allocation6 [shape = 's32[1]{0}', space=sflag, size = 0x4, scoped, tag = 'scoped memory for tpu_custom_call.1']
    #allocation7 [shape = 'u8[4096]{0}', space=vmem, size = 0x1000, scoped, tag = 'input window, operand 2, single buffered']
    #allocation8 [shape = 'u8[16384]{0}', space=vmem, size = 0x4000, scoped, tag = 'input window, operand 4, single buffered']
    #allocation9 [shape = 's32[1]{0}', space=sflag, size = 0x4, scoped, tag = 'scoped memory for tpu_custom_call.1']
    #allocation10 [shape = 'u8[32768]{0}', space=vmem, size = 0x8000, scoped, tag = 'output window, operand 0, single buffered']
    %11 = vsyncpa [#allocation3], 0
    %12 = vsyncpa [#allocation6], 0
    %13 = vsyncpa [#allocation9], 0
    %14 = vsyncpa [#allocation4], 0
    // Predicated region
    $region2: #{tpu_custom_call.1} parent=1 // pred_check
      _
    $region3: #{tpu_custom_call.1} parent=1 // pred_check_branch
      %16 = sbr.rel (0) target = $region5
    $region4: #{tpu_custom_call.1} parent=1 // pred_region
      %s18 = ssub.s32 256, 256
      %19 = vsyncadd [#allocation3], %s18
      %s20 = sshll.u32 [#allocation2], 4
      %s21 = int_to_ptr.vmem [resolvable:$true] %s20
      %26 = dma.hbm_to_vmem [thread:$0]  %s0, 256, %s21, [#allocation3], 128, 128, 8
    $region5: #{tpu_custom_call.1} parent=1 // pred_fallthru
      _
    // Predicated region
    $region6: #{tpu_custom_call.1} parent=1 // pred_check
      _
    $region7: #{tpu_custom_call.1} parent=1 // pred_check_branch
      %28 = sbr.rel (0) target = $region9
    $region8: #{tpu_custom_call.1} parent=1 // pred_region
      %s30 = ssub.s32 256, 256
      %31 = vsyncadd [#allocation6], %s30
      %s32 = sshll.u32 [#allocation5], 4
      %s33 = int_to_ptr.vmem [resolvable:$true] %s32
      %38 = dma.hbm_to_vmem [thread:$0]  %s1, 256, %s33, [#allocation6], 128, 128, 8
    $region9: #{tpu_custom_call.1} parent=1 // pred_fallthru
      _
    // Predicated region
    $region10: #{tpu_custom_call.1} parent=1 // pred_check
      _
    $region11: #{tpu_custom_call.1} parent=1 // pred_check_branch
      %40 = sbr.rel (0) target = $region13
    $region12: #{tpu_custom_call.1} parent=1 // pred_region
      %s42 = ssub.s32 128, 128
      %43 = vsyncadd [#allocation6], %s42
      %s44 = sshll.u32 [#allocation7], 4
      %s45 = int_to_ptr.vmem [resolvable:$true] %s44
      %50 = dma.hbm_to_vmem [thread:$0]  %s2, 128, %s45, [#allocation6], 64, 64, 4
    $region13: #{tpu_custom_call.1} parent=1 // pred_fallthru
      _
    // Predicated region
    $region14: #{tpu_custom_call.1} parent=1 // pred_check
      _
    $region15: #{tpu_custom_call.1} parent=1 // pred_check_branch
      %52 = sbr.rel (0) target = $region17
    $region16: #{tpu_custom_call.1} parent=1 // pred_region
      _
    $region17: #{tpu_custom_call.1} parent=1 // pred_fallthru
      _
    // Predicated region
    $region18: #{tpu_custom_call.1} parent=1 // pred_check
      _
    $region19: #{tpu_custom_call.1} parent=1 // pred_check_branch
      %54 = sbr.rel (0) target = $region21
    $region20: #{tpu_custom_call.1} parent=1 // pred_region
      %s56 = ssub.s32 512, 512
      %57 = vsyncadd [#allocation9], %s56
      %s58 = sshll.u32 [#allocation8], 4
      %s59 = int_to_ptr.vmem [resolvable:$true] %s58
      %64 = dma.hbm_to_vmem [thread:$0]  %s4, 512, %s59, [#allocation9], 128, 128, 8
    $region21: #{tpu_custom_call.1} parent=1 // pred_fallthru
      _
    // Predicated region
    $region22: #{tpu_custom_call.1} parent=1 // pred_check
      _
    $region23: #{tpu_custom_call.1} parent=1 // pred_check_branch
      %66 = sbr.rel (0) target = $region25
    $region24: #{tpu_custom_call.1} parent=1 // pred_region
      _
    $region25: #{tpu_custom_call.1} parent=1 // pred_fallthru
      _
    // Predicated region
    $region26: #{tpu_custom_call.1} parent=1 // pred_check
      _
    $region27: #{tpu_custom_call.1} parent=1 // pred_check_branch
      %68 = sbr.rel (0) target = $region29
    $region28: #{tpu_custom_call.1} parent=1 // pred_region
      %69 = dma.done [#allocation3], 256
    $region29: #{tpu_custom_call.1} parent=1 // pred_fallthru
      _
    // Predicated region
    $region30: #{tpu_custom_call.1} parent=1 // pred_check
      _
    $region31: #{tpu_custom_call.1} parent=1 // pred_check_branch
      %71 = sbr.rel (0) target = $region33
    $region32: #{tpu_custom_call.1} parent=1 // pred_region
      %72 = dma.done [#allocation6], 256
    $region33: #{tpu_custom_call.1} parent=1 // pred_fallthru
      _
    // Predicated region
    $region34: #{tpu_custom_call.1} parent=1 // pred_check
      _
    $region35: #{tpu_custom_call.1} parent=1 // pred_check_branch
      %74 = sbr.rel (0) target = $region37
    $region36: #{tpu_custom_call.1} parent=1 // pred_region
      %75 = dma.done [#allocation6], 128
    $region37: #{tpu_custom_call.1} parent=1 // pred_fallthru
      _
    // Predicated region
    $region38: #{tpu_custom_call.1} parent=1 // pred_check
      _
    $region39: #{tpu_custom_call.1} parent=1 // pred_check_branch
      %77 = sbr.rel (0) target = $region41
    $region40: #{tpu_custom_call.1} parent=1 // pred_region
      %78 = dma.done [#allocation9], 512
    $region41: #{tpu_custom_call.1} parent=1 // pred_fallthru
      _
    %v80 = vld [vmem:[#allocation2] sm:$0xff]
    %v81 = vld [vmem:[#allocation2 + $0x8] sm:$0xff]
    %v82 = vpack.c.bf16 %v81, %v80
    %v83 = vld [vmem:[#allocation7] sm:$0xf]
    %v84 = vld [vmem:[#allocation7 + $0x4] sm:$0xf]
    %v85 = vld [vmem:[%s3] sm:$0x1]
    %v87 = vlaneseq
    %v88 = vshrl.u32 %v87, 7
    %v89 = vsub.s32 0, %v88
    %v90 = vrot.slane %v85, %v89
    %v94 = vunpack.c.l.b16 %v83
    %v95 = vunpack.c.l.b16 %v84
    %v96 = vpack.c.b16 %v95, %v94
    %vm98 = vcmask 130048
    %v100 = vsel %vm98, %v82, 0
    %102 = vmatprep.subr.bf16.mxu0 0
    %103 = vmatpush1.bf16.msra.mxu0 0
    %104 = vmatprep.subr.bf16.mxu0 0
    %105 = vmatpush1.bf16.msra.mxu0 0
    %106 = vmatprep.subr.bf16.mxu0 0
    %107 = vmatpush1.bf16.msra.mxu0 0
    %108 = vmatprep.subr.bf16.mxu0 0
    %109 = vmatpush1.bf16.msra.mxu0 0
    %110 = vmatprep.subr.bf16.mxu0 0
    %111 = vmatpush1.bf16.msra.mxu0 0
    %112 = vmatprep.subr.bf16.mxu0 0
    %113 = vmatpush1.bf16.msra.mxu0 0
    %114 = vmatprep.subr.bf16.mxu0 0
    %115 = vmatpush1.bf16.msra.mxu0 0
    %116 = vmatprep.subr.bf16.mxu0 0
    %117 = vmatpush1.bf16.msra.mxu0 %v96
    %118 = vmatprep.subr.bf16.mxu0 0
    %119 = vmatpush2.bf16.msra.mxu0 0
    %120 = vmatprep.subr.bf16.mxu0 0
    %121 = vmatpush2.bf16.msra.mxu0 0
    %122 = vmatprep.subr.bf16.mxu0 0
    %123 = vmatpush2.bf16.msra.mxu0 0
    %124 = vmatprep.subr.bf16.mxu0 0
    %125 = vmatpush2.bf16.msra.mxu0 0
    %126 = vmatprep.subr.bf16.mxu0 0
    %127 = vmatpush2.bf16.msra.mxu0 0
    %128 = vmatprep.subr.bf16.mxu0 0
    %129 = vmatpush2.bf16.msra.mxu0 0
    %130 = vmatprep.subr.bf16.mxu0 0
    %131 = vmatpush2.bf16.msra.mxu0 0
    %132 = vmatprep.subr.bf16.mxu0 0
    %133 = vmatpush2.bf16.msra.mxu0 0
    %134 = vmatprep.mubr.bf16.mxu0 0
    %135 = vmatmul.mubr.bf16.gmra.mxu0 %v100
    %v136 = vpop.f32.mrf.mxu0
    %v137 = vadd.f32 %v90, %v136
    %v138 = vpop.f32.mrf.mxu0
    %v139 = vpop.f32.mrf.mxu0
    %v140 = vadd.f32 %v90, %v139
    %v141 = vpop.f32.mrf.mxu0
    %142 = vdwg.mxu0
    %v143 = vmax.f32 %v137, 0.0
    %v144 = vmax.f32 %v140, 0.0
    %v145 = vpack.c.bf16 %v144, %v143
    %v146 = vld [vmem:[#allocation8] sm:$0xff]
    %v147 = vld [vmem:[#allocation8 + $0x8] sm:$0xff]
    %v148 = vld [vmem:[#allocation8 + $0x10] sm:$0xff]
    %v149 = vld [vmem:[#allocation8 + $0x18] sm:$0xff]
    %v150 = vld [vmem:[%s5] sm:$0x3]
    %v152 = vlaneseq
    %v153 = vshrl.u32 %v152, 7
    %v154 = vsub.s32 0, %v153
    %v155 = vrot.slane %v150, %v154
    %v156 = vlaneseq
    %v157 = vshrl.u32 %v156, 7
    %v158 = vsub.s32 1, %v157
    %v159 = vrot.slane %v150, %v158
    %v166 = vunpack.c.l.b16 %v146
    %v167 = vunpack.c.h.b16 %v146
    %v168 = vunpack.c.l.b16 %v147
    %v169 = vunpack.c.h.b16 %v147
    %v170 = vunpack.c.l.b16 %v148
    %v171 = vunpack.c.h.b16 %v148
    %v172 = vunpack.c.l.b16 %v149
    %v173 = vunpack.c.h.b16 %v149
    %v174 = vpack.c.b16 %v168, %v166
    %v175 = vpack.c.b16 %v169, %v167
    %v176 = vpack.c.b16 %v172, %v170
    %v177 = vpack.c.b16 %v173, %v171
    %vm182 = vcmask 261120
    %v184 = vsel %vm182, %v145, 0
    %186 = vmatprep.subr.bf16.mxu0 0
    %187 = vmatpush1.bf16.msra.mxu0 0
    %188 = vmatprep.subr.bf16.mxu0 0
    %189 = vmatpush1.bf16.msra.mxu0 0
    %190 = vmatprep.subr.bf16.mxu0 0
    %191 = vmatpush1.bf16.msra.mxu0 0
    %192 = vmatprep.subr.bf16.mxu0 0
    %193 = vmatpush1.bf16.msra.mxu0 0
    %194 = vmatprep.subr.bf16.mxu0 0
    %195 = vmatpush1.bf16.msra.mxu0 0
    %196 = vmatprep.subr.bf16.mxu0 0
    %197 = vmatpush1.bf16.msra.mxu0 0
    %198 = vmatprep.subr.bf16.mxu0 %v177
    %199 = vmatpush1.bf16.msra.mxu0 %v176
    %200 = vmatprep.subr.bf16.mxu0 %v175
    %201 = vmatpush1.bf16.msra.mxu0 %v174
    %202 = vmatprep.subr.bf16.mxu0 0
    %203 = vmatpush2.bf16.msra.mxu0 0
    %204 = vmatprep.subr.bf16.mxu0 0
    %205 = vmatpush2.bf16.msra.mxu0 0
    %206 = vmatprep.subr.bf16.mxu0 0
    %207 = vmatpush2.bf16.msra.mxu0 0
    %208 = vmatprep.subr.bf16.mxu0 0
    %209 = vmatpush2.bf16.msra.mxu0 0
    %210 = vmatprep.subr.bf16.mxu0 0
    %211 = vmatpush2.bf16.msra.mxu0 0
    %212 = vmatprep.subr.bf16.mxu0 0
    %213 = vmatpush2.bf16.msra.mxu0 0
    %214 = vmatprep.subr.bf16.mxu0 0
    %215 = vmatpush2.bf16.msra.mxu0 0
    %216 = vmatprep.subr.bf16.mxu0 0
    %217 = vmatpush2.bf16.msra.mxu0 0
    %218 = vmatprep.mubr.bf16.mxu0 0
    %219 = vmatmul.mubr.bf16.gmra.mxu0 %v184
    %v220 = vpop.f32.mrf.mxu0
    %v221 = vadd.f32 %v155, %v220
    %v222 = vpop.f32.mrf.mxu0
    %v223 = vadd.f32 %v159, %v222
    %v224 = vpop.f32.mrf.mxu0
    %v225 = vadd.f32 %v155, %v224
    %v226 = vpop.f32.mrf.mxu0
    %v227 = vadd.f32 %v159, %v226
    %228 = vdwg.mxu0
    %v229 = vmax.f32 %v223, 1e-06
    %v230 = vmax.f32 %v227, 1e-06
    %v231 = vmin.f32 %v229, 1.0
    %v232 = vmin.f32 %v230, 1.0
    %v233 = vld [vmem:[#allocation5] sm:$0xff]
    %v234 = vld [vmem:[#allocation5 + $0x8] sm:$0xff]
    %v235 = vmul.f32 %v231, %v233
    %v236 = vmul.f32 %v232, %v234
    %v237 = vadd.f32 %v221, %v235
    %v238 = vadd.f32 %v225, %v236
    %v239 = vtanh.pop %v237
    %v240 = vtanh.pop %v238
    %v241 = vsub.f32 %v239, %v221
    %v242 = vsub.f32 %v240, %v225
    %v243 = vrcp.pop %v231
    %v244 = vmul.f32 %v241, %v243
    %v245 = vrcp.pop %v232
    %v246 = vmul.f32 %v242, %v245
    %v247 = vmul.f32 %v244, %v244
    %v248 = vmul.f32 %v246, %v246
    %v249 = vmul.f32 %v247, -0.5
    %v250 = vmul.f32 %v248, -0.5
    %v251 = vlog2.pop %v231
    %v252 = vmul.f32 %v251, 0.6931472
    %v253 = vlog2.pop %v232
    %v254 = vmul.f32 %v253, 0.6931472
    %v255 = vsub.f32 %v249, %v252
    %v256 = vsub.f32 %v250, %v254
    %v257 = vsub.f32 %v255, 0.9189385
    %v258 = vsub.f32 %v256, 0.9189385
    %259 = vst [vmem:[#allocation10] sm:$0xff] %v239
    %260 = vst [vmem:[#allocation10 + $0x20] sm:$0xff] %v240
    %261 = vst [vmem:[#allocation10 + $0x8] sm:$0xff] %v257
    %262 = vst [vmem:[#allocation10 + $0x28] sm:$0xff] %v258
    %263 = vst [vmem:[#allocation10 + $0x10] sm:$0xff] %v221
    %264 = vst [vmem:[#allocation10 + $0x30] sm:$0xff] %v225
    %265 = vst [vmem:[#allocation10 + $0x18] sm:$0xff] %v231
    %266 = vst [vmem:[#allocation10 + $0x38] sm:$0xff] %v232
    // Predicated region
    $region42: #{tpu_custom_call.1} parent=1 // pred_check
      _
    $region43: #{tpu_custom_call.1} parent=1 // pred_check_branch
      %268 = sbr.rel (0) target = $region45
    $region44: #{tpu_custom_call.1} parent=1 // pred_region
      %s270 = ssub.s32 1024, 1024
      %271 = vsyncadd [#allocation4], %s270
      %s272 = sshll.u32 [#allocation10], 4
      %s273 = int_to_ptr.vmem [resolvable:$true] %s272
      %278 = dma.vmem_to_hbm [thread:$0]  %s273, 1024, %s6, [#allocation4], 512, 512, 32
    $region45: #{tpu_custom_call.1} parent=1 // pred_fallthru
      _
    // Predicated region
    $region46: #{tpu_custom_call.1} parent=1 // pred_check
      _
    $region47: #{tpu_custom_call.1} parent=1 // pred_check_branch
      %280 = sbr.rel (0) target = $region49
    $region48: #{tpu_custom_call.1} parent=1 // pred_region
      %281 = dma.done [#allocation4], 1024
    $region49: #{tpu_custom_call.1} parent=1 // pred_fallthru
      _
    %282 = vsyncpa [#allocation3], 1
    %283 = vsyncpa [#allocation6], 1
    %284 = vsyncpa [#allocation9], 1
    %285 = vsyncpa [#allocation4], 1

</llo_original>
